<compile_context>
chip_gen: v5e
topology: v5e:2x2
jax: 0.10.0
libtpu: 0.0.40
codegen_flags: <defaults>
</compile_context>

<pallas_src>
import numpy as np
import jax
import jax.numpy as jnp
from jax.experimental import pallas as pl
from jax.experimental.pallas import tpu as pltpu


_SEL_BUDGET_BYTES = 4 * 1024 * 1024   # per-source selector budget
_MAX_CONTRACT = 512                   # cap on matmul contraction dim (g*Wi)


def _row_ranges(Hi, H):
    """For each source row hi, the contiguous [start, length) of output rows
    mapping to it under the PyTorch 'nearest' rule src = floor(dst*Hi/H)."""
    starts = [(hi * H + Hi - 1) // Hi for hi in range(Hi + 1)]  # ceil(hi*H/Hi)
    return [(starts[hi], starts[hi + 1] - starts[hi]) for hi in range(Hi)]


def _uniform_groupings(Hi, H):
    """All (g, L, pattern) with g | Hi such that chunks of g source rows have
    identical relative output-row patterns (so one selector serves all chunks).
    pattern = ((rel_start, h_len),)*g ; L = output rows per chunk.  g = Hi is
    always valid (single chunk)."""
    rr = _row_ranges(Hi, H)
    res = []
    for g in range(1, Hi + 1):
        if Hi % g:
            continue
        ngrp = Hi // g
        if H % ngrp:
            continue
        L = H // ngrp
        pat0, ok = None, True
        for j in range(ngrp):
            base = rr[j * g][0]
            if base != j * L:
                ok = False
                break
            pat = tuple((rr[j * g + r][0] - base, rr[j * g + r][1])
                        for r in range(g))
            if pat0 is None:
                pat0 = pat
            elif pat != pat0:
                ok = False
                break
        if ok:
            res.append((g, L, pat0))
    return res


def _choose_grouping(Hi, Wi, H, W, sel_itemsize):
    opts = _uniform_groupings(Hi, H)
    good = [(g, L, p) for (g, L, p) in opts
            if g * Wi <= _MAX_CONTRACT
            and g * Wi * L * W * sel_itemsize <= _SEL_BUDGET_BYTES]
    if good:
        return max(good, key=lambda t: t[0])
    # TODO(synk): extremely large non-uniform resizes would need a spatially
    # tiled selector; fall back to the smallest uniform grouping.
    return min(opts, key=lambda t: t[0])


def _build_selector(Wi, W, pattern, L, dtype):
    """One-hot (g*Wi, L*W) matrix folding the nearest width resize and the
    height replication for one uniform group of g source rows."""
    w_src = (np.arange(W) * Wi) // W
    rw = (np.arange(Wi)[:, None] == w_src[None, :]).astype(np.float32)  # (Wi, W)
    g = len(pattern)
    S = np.zeros((g * Wi, L * W), np.float32)
    for r, (rs, hl) in enumerate(pattern):
        for d in range(hl):
            S[r * Wi:(r + 1) * Wi, (rs + d) * W:(rs + d + 1) * W] = rw
    return jnp.asarray(S).astype(dtype)


def _pick_c_tile(C, per_channel_bytes, budget_bytes):
    """Largest channel tile dividing C that is a multiple of 8 (or == C) and
    keeps double-buffered blocks under the budget."""
    cands = [c for c in range(1, C + 1) if C % c == 0 and (c == C or c % 8 == 0)]
    fitting = [c for c in cands if 2 * c * per_channel_bytes <= budget_bytes]
    return max(fitting) if fitting else min(cands)


def _make_cbfuse_kernel(n_src, n_sel, metas):
    def kernel(*refs):
        src_refs = refs[:n_src]
        sel_refs = refs[n_src:n_src + n_sel]
        last_ref = refs[n_src + n_sel]
        out_ref = refs[n_src + n_sel + 1]

        # Dense, lane-aligned init of the output block with the target tensor.
        out_ref[...] = last_ref[...]

        for s_ref, meta in zip(src_refs, metas):
            if meta["identity"]:
                out_ref[...] += s_ref[...].astype(out_ref.dtype)
                continue
            sel = sel_refs[meta["sel_idx"]][...]                 # (g*Wi, L*W)
            g, L = meta["g"], meta["L"]
            Wi, W, ng = meta["Wi"], meta["W"], meta["ng"]
            for j in range(ng):                                  # static trip count
                blk = s_ref[0, :, pl.ds(j * g * Wi, g * Wi)]     # (c_tile, g*Wi)
                if blk.dtype != sel.dtype:
                    blk = blk.astype(sel.dtype)
                up = jnp.dot(blk, sel, preferred_element_type=jnp.float32)
                out_ref[0, :, pl.ds(j * L * W, L * W)] += up.astype(out_ref.dtype)

    return kernel


def cbfuse(xs, idx):
    """Pallas implementation of CBFuse.forward.

    xs: list where xs[:-1] are lists of NCHW arrays and xs[-1] is an NCHW array.
    idx: list of ints selecting one tensor out of each xs[i] (i < len(xs)-1).
    """
    selected = [x[idx[i]] for i, x in enumerate(xs[:-1])]   # python-level select
    last = xs[-1]
    N, C, H, W = last.shape
    HW = H * W
    out_dtype = last.dtype
    out_itemsize = jnp.dtype(out_dtype).itemsize

    srcs_flat, sels, metas = [], [], []
    for s in selected:
        _, _, Hi, Wi = s.shape
        srcs_flat.append(s.reshape(N, C, Hi * Wi))
        if (Hi, Wi) == (H, W):
            metas.append({"identity": True})
            continue
        sel_dtype = s.dtype if jnp.issubdtype(s.dtype, jnp.floating) else jnp.float32
        g, L, pattern = _choose_grouping(Hi, Wi, H, W, jnp.dtype(sel_dtype).itemsize)
        metas.append({"identity": False, "sel_idx": len(sels),
                      "g": g, "L": L, "Wi": Wi, "W": W, "ng": Hi // g})
        sels.append(_build_selector(Wi, W, pattern, L, sel_dtype))

    last_flat = last.reshape(N, C, HW)

    # Channel tiling so double-buffered blocks + resident selectors fit VMEM
    # comfortably on every generation (incl. v7x's 64 MiB).
    per_channel_bytes = 2 * HW * out_itemsize + sum(
        sf.shape[2] * jnp.dtype(sf.dtype).itemsize for sf in srcs_flat)
    sel_bytes = sum(int(s.size) * jnp.dtype(s.dtype).itemsize for s in sels)
    c_tile = _pick_c_tile(C, per_channel_bytes,
                          max(20 * 1024 * 1024 - 2 * sel_bytes, 0))
    n_ct = C // c_tile

    src_specs = [pl.BlockSpec((1, c_tile, sf.shape[2]), lambda n, c: (n, c, 0))
                 for sf in srcs_flat]
    sel_specs = [pl.BlockSpec(s.shape, lambda n, c: (0, 0)) for s in sels]
    io_spec = pl.BlockSpec((1, c_tile, HW), lambda n, c: (n, c, 0))

    flops = 0
    for sf, m in zip(srcs_flat, metas):
        if m["identity"]:
            flops += N * C * HW
        else:
            flops += 2 * N * C * sf.shape[2] * m["L"] * m["W"]
    bytes_accessed = int(
        sum(int(a.size) * jnp.dtype(a.dtype).itemsize
            for a in (*srcs_flat, *sels, last_flat))
        + N * C * HW * out_itemsize)
    cost = pl.CostEstimate(flops=int(flops), transcendentals=0,
                           bytes_accessed=bytes_accessed)

    needed = 2 * c_tile * per_channel_bytes + 2 * sel_bytes
    vmem_limit = int(max(32 * 1024 * 1024,
                         min(64 * 1024 * 1024, needed + 8 * 1024 * 1024)))

    kernel = _make_cbfuse_kernel(len(srcs_flat), len(sels), metas)

    out_flat = pl.pallas_call(
        kernel,
        out_shape=jax.ShapeDtypeStruct((N, C, HW), out_dtype),
        grid=(N, n_ct),
        in_specs=src_specs + sel_specs + [io_spec],
        out_specs=io_spec,
        compiler_params=pltpu.CompilerParams(
            dimension_semantics=("parallel", "parallel"),
            vmem_limit_bytes=vmem_limit),
        cost_estimate=cost,
    )(*srcs_flat, *sels, last_flat)

    return out_flat.reshape(N, C, H, W)


# ----------------------------- pure-JAX reference -----------------------------

def _nearest_up_ref(x, H, W):
    _, _, Hi, Wi = x.shape
    ri = (jnp.arange(H) * Hi) // H
    ci = (jnp.arange(W) * Wi) // W
    return x[:, :, ri, :][:, :, :, ci]


def _cbfuse_ref(xs, idx):
    last = xs[-1]
    H, W = last.shape[2], last.shape[3]
    res = [_nearest_up_ref(x[idx[i]], H, W) for i, x in enumerate(xs[:-1])]
    return sum(res) + last


if __name__ == "__main__":
    key = jax.random.PRNGKey(0)
    k0, k1, k2, k3, k4, k5 = jax.random.split(key, 6)

    N, C = 2, 4
    # xs[0]: two candidates, idx[0]=1 picks the (4,4) one (4x upsample).
    xs0 = [jax.random.normal(k0, (N, C, 8, 8), jnp.float32),
           jax.random.normal(k1, (N, C, 4, 4), jnp.float32)]
    # xs[1]: two candidates, idx[1]=0 picks the (8,8) one (2x upsample).
    xs1 = [jax.random.normal(k2, (N, C, 8, 8), jnp.float32),
           jax.random.normal(k3, (N, C, 16, 16), jnp.float32)]
    # xs[2]: single candidate with non-integer scale factors (6,10) -> (16,16).
    xs2 = [jax.random.normal(k5, (N, C, 6, 10), jnp.float32)]
    # xs[-1]: target-resolution tensor, defines output size (16,16).
    xs_last = jax.random.normal(k4, (N, C, 16, 16), jnp.float32)

    xs = [xs0, xs1, xs2, xs_last]
    idx = [1, 0, 0]

    out = jax.block_until_ready(cbfuse(xs, idx))
    ref = _cbfuse_ref(xs, idx)

    if out.shape != ref.shape or not jnp.allclose(out, ref, atol=1e-5, rtol=1e-5):
        raise AssertionError("Pallas CBFuse does not match reference")

    print("KERNEL_OK")
</pallas_src>

<mosaic_0001>
module attributes {stable_mosaic.version = 11 : i64} {
  func.func @kernel(%arg0: i32, %arg1: i32, %arg2: memref<1x4x16xf32, #tpu.memory_space<vmem>>, %arg3: memref<1x4x64xf32, #tpu.memory_space<vmem>>, %arg4: memref<1x4x60xf32, #tpu.memory_space<vmem>>, %arg5: memref<16x256xf32, #tpu.memory_space<vmem>>, %arg6: memref<64x256xf32, #tpu.memory_space<vmem>>, %arg7: memref<60x256xf32, #tpu.memory_space<vmem>>, %arg8: memref<1x4x256xf32, #tpu.memory_space<vmem>>, %arg9: memref<1x4x256xf32, #tpu.memory_space<vmem>>) attributes {dimension_semantics = [#tpu.dimension_semantics<parallel>, #tpu.dimension_semantics<parallel>], iteration_bounds = array<i64: 2, 1>, scalar_prefetch = 0 : i64, scratch_operands = 0 : i64, tpu.core_type = #tpu.core_type<tc>, window_params = [{transform_indices = @transform_0, window_bounds = array<i64: 1, 4, 16>}, {transform_indices = @transform_1, window_bounds = array<i64: 1, 4, 64>}, {transform_indices = @transform_2, window_bounds = array<i64: 1, 4, 60>}, {pipeline_mode = #tpu.pipeline_mode<synchronous>, transform_indices = @transform_3, window_bounds = array<i64: 16, 256>}, {pipeline_mode = #tpu.pipeline_mode<synchronous>, transform_indices = @transform_4, window_bounds = array<i64: 64, 256>}, {pipeline_mode = #tpu.pipeline_mode<synchronous>, transform_indices = @transform_5, window_bounds = array<i64: 60, 256>}, {transform_indices = @transform_6, window_bounds = array<i64: 1, 4, 256>}, {transform_indices = @transform_7, window_bounds = array<i64: 1, 4, 256>}]} {
    %c0 = arith.constant 0 : index
    %c0_0 = arith.constant 0 : index
    %c0_1 = arith.constant 0 : index
    %0 = vector.load %arg8[%c0, %c0_0, %c0_1] : memref<1x4x256xf32, #tpu.memory_space<vmem>>, vector<1x4x256xf32>
    %c0_2 = arith.constant 0 : index
    %c0_3 = arith.constant 0 : index
    %c0_4 = arith.constant 0 : index
    %1 = vector.load %arg9[%c0_2, %c0_3, %c0_4] : memref<1x4x256xf32, #tpu.memory_space<vmem>>, vector<1x4x256xf32>
    tpu.vector_store %arg9[%c0_2, %c0_3, %c0_4], %0 {strides = array<i32>} : memref<1x4x256xf32, #tpu.memory_space<vmem>>, vector<1x4x256xf32>,
    %c0_5 = arith.constant 0 : index
    %c0_6 = arith.constant 0 : index
    %2 = vector.load %arg5[%c0_5, %c0_6] : memref<16x256xf32, #tpu.memory_space<vmem>>, vector<16x256xf32>
    %c0_7 = arith.constant 0 : index
    %c0_8 = arith.constant 0 : index
    %c0_9 = arith.constant 0 : index
    %3 = vector.load %arg2[%c0_7, %c0_8, %c0_9] : memref<1x4x16xf32, #tpu.memory_space<vmem>>, vector<1x4x16xf32>
    %4 = vector.shape_cast %3 : vector<1x4x16xf32> to vector<4x16xf32>
    %cst = arith.constant dense<0.000000e+00> : vector<4x256xf32>
    %5 = tpu.matmul %4, %2, %cst {dimension_numbers = #tpu.dot_dimension_numbers<[1], [0], [0], [1], [0, 0, 1, 1], [], []>} : vector<4x16xf32>, vector<16x256xf32>, vector<4x256xf32> -> vector<4x256xf32>
    %c0_10 = arith.constant 0 : index
    %c0_11 = arith.constant 0 : index
    %c0_12 = arith.constant 0 : index
    %6 = vector.load %arg9[%c0_10, %c0_11, %c0_12] : memref<1x4x256xf32, #tpu.memory_space<vmem>>, vector<1x4x256xf32>
    %7 = vector.shape_cast %6 : vector<1x4x256xf32> to vector<4x256xf32>
    %8 = arith.addf %7, %5 : vector<4x256xf32>
    %c0_13 = arith.constant 0 : index
    %c0_14 = arith.constant 0 : index
    %c0_15 = arith.constant 0 : index
    %9 = vector.load %arg9[%c0_13, %c0_14, %c0_15] : memref<1x4x256xf32, #tpu.memory_space<vmem>>, vector<1x4x256xf32>
    %10 = vector.shape_cast %9 : vector<1x4x256xf32> to vector<4x256xf32>
    %11 = vector.shape_cast %8 : vector<4x256xf32> to vector<1x4x256xf32>
    tpu.vector_store %arg9[%c0_13, %c0_14, %c0_15], %11 {strides = array<i32>} : memref<1x4x256xf32, #tpu.memory_space<vmem>>, vector<1x4x256xf32>,
    %c0_16 = arith.constant 0 : index
    %c0_17 = arith.constant 0 : index
    %12 = vector.load %arg6[%c0_16, %c0_17] : memref<64x256xf32, #tpu.memory_space<vmem>>, vector<64x256xf32>
    %c0_18 = arith.constant 0 : index
    %c0_19 = arith.constant 0 : index
    %c0_20 = arith.constant 0 : index
    %13 = vector.load %arg3[%c0_18, %c0_19, %c0_20] : memref<1x4x64xf32, #tpu.memory_space<vmem>>, vector<1x4x64xf32>
    %14 = vector.shape_cast %13 : vector<1x4x64xf32> to vector<4x64xf32>
    %cst_21 = arith.constant dense<0.000000e+00> : vector<4x256xf32>
    %15 = tpu.matmul %14, %12, %cst_21 {dimension_numbers = #tpu.dot_dimension_numbers<[1], [0], [0], [1], [0, 0, 1, 1], [], []>} : vector<4x64xf32>, vector<64x256xf32>, vector<4x256xf32> -> vector<4x256xf32>
    %c0_22 = arith.constant 0 : index
    %c0_23 = arith.constant 0 : index
    %c0_24 = arith.constant 0 : index
    %16 = vector.load %arg9[%c0_22, %c0_23, %c0_24] : memref<1x4x256xf32, #tpu.memory_space<vmem>>, vector<1x4x256xf32>
    %17 = vector.shape_cast %16 : vector<1x4x256xf32> to vector<4x256xf32>
    %18 = arith.addf %17, %15 : vector<4x256xf32>
    %c0_25 = arith.constant 0 : index
    %c0_26 = arith.constant 0 : index
    %c0_27 = arith.constant 0 : index
    %19 = vector.load %arg9[%c0_25, %c0_26, %c0_27] : memref<1x4x256xf32, #tpu.memory_space<vmem>>, vector<1x4x256xf32>
    %20 = vector.shape_cast %19 : vector<1x4x256xf32> to vector<4x256xf32>
    %21 = vector.shape_cast %18 : vector<4x256xf32> to vector<1x4x256xf32>
    tpu.vector_store %arg9[%c0_25, %c0_26, %c0_27], %21 {strides = array<i32>} : memref<1x4x256xf32, #tpu.memory_space<vmem>>, vector<1x4x256xf32>,
    %c0_28 = arith.constant 0 : index
    %c0_29 = arith.constant 0 : index
    %22 = vector.load %arg7[%c0_28, %c0_29] : memref<60x256xf32, #tpu.memory_space<vmem>>, vector<60x256xf32>
    %c0_30 = arith.constant 0 : index
    %c0_31 = arith.constant 0 : index
    %c0_32 = arith.constant 0 : index
    %23 = vector.load %arg4[%c0_30, %c0_31, %c0_32] : memref<1x4x60xf32, #tpu.memory_space<vmem>>, vector<1x4x60xf32>
    %24 = vector.shape_cast %23 : vector<1x4x60xf32> to vector<4x60xf32>
    %cst_33 = arith.constant dense<0.000000e+00> : vector<4x256xf32>
    %25 = tpu.matmul %24, %22, %cst_33 {dimension_numbers = #tpu.dot_dimension_numbers<[1], [0], [0], [1], [0, 0, 1, 1], [], []>} : vector<4x60xf32>, vector<60x256xf32>, vector<4x256xf32> -> vector<4x256xf32>
    %c0_34 = arith.constant 0 : index
    %c0_35 = arith.constant 0 : index
    %c0_36 = arith.constant 0 : index
    %26 = vector.load %arg9[%c0_34, %c0_35, %c0_36] : memref<1x4x256xf32, #tpu.memory_space<vmem>>, vector<1x4x256xf32>
    %27 = vector.shape_cast %26 : vector<1x4x256xf32> to vector<4x256xf32>
    %28 = arith.addf %27, %25 : vector<4x256xf32>
    %c0_37 = arith.constant 0 : index
    %c0_38 = arith.constant 0 : index
    %c0_39 = arith.constant 0 : index
    %29 = vector.load %arg9[%c0_37, %c0_38, %c0_39] : memref<1x4x256xf32, #tpu.memory_space<vmem>>, vector<1x4x256xf32>
    %30 = vector.shape_cast %29 : vector<1x4x256xf32> to vector<4x256xf32>
    %31 = vector.shape_cast %28 : vector<4x256xf32> to vector<1x4x256xf32>
    tpu.vector_store %arg9[%c0_37, %c0_38, %c0_39], %31 {strides = array<i32>} : memref<1x4x256xf32, #tpu.memory_space<vmem>>, vector<1x4x256xf32>,
    return
  }
  func.func @transform_0(%arg0: i32, %arg1: i32) -> (i32, i32, i32) {
    %c0_i32 = arith.constant 0 : i32
    %c0_i32_0 = arith.constant 0 : i32
    return %arg0, %arg1, %c0_i32 : i32, i32, i32
  }
  func.func @transform_1(%arg0: i32, %arg1: i32) -> (i32, i32, i32) {
    %c0_i32 = arith.constant 0 : i32
    %c0_i32_0 = arith.constant 0 : i32
    return %arg0, %arg1, %c0_i32 : i32, i32, i32
  }
  func.func @transform_2(%arg0: i32, %arg1: i32) -> (i32, i32, i32) {
    %c0_i32 = arith.constant 0 : i32
    %c0_i32_0 = arith.constant 0 : i32
    return %arg0, %arg1, %c0_i32 : i32, i32, i32
  }
  func.func @transform_3(%arg0: i32, %arg1: i32) -> (i32, i32) {
    %c0_i32 = arith.constant 0 : i32
    %c0_i32_0 = arith.constant 0 : i32
    %c0_i32_1 = arith.constant 0 : i32
    return %c0_i32, %c0_i32_0 : i32, i32
  }
  func.func @transform_4(%arg0: i32, %arg1: i32) -> (i32, i32) {
    %c0_i32 = arith.constant 0 : i32
    %c0_i32_0 = arith.constant 0 : i32
    %c0_i32_1 = arith.constant 0 : i32
    return %c0_i32, %c0_i32_0 : i32, i32
  }
  func.func @transform_5(%arg0: i32, %arg1: i32) -> (i32, i32) {
    %c0_i32 = arith.constant 0 : i32
    %c0_i32_0 = arith.constant 0 : i32
    %c0_i32_1 = arith.constant 0 : i32
    return %c0_i32, %c0_i32_0 : i32, i32
  }
  func.func @transform_6(%arg0: i32, %arg1: i32) -> (i32, i32, i32) {
    %c0_i32 = arith.constant 0 : i32
    %c0_i32_0 = arith.constant 0 : i32
    return %arg0, %arg1, %c0_i32 : i32, i32, i32
  }
  func.func @transform_7(%arg0: i32, %arg1: i32) -> (i32, i32, i32) {
    %c0_i32 = arith.constant 0 : i32
    %c0_i32_0 = arith.constant 0 : i32
    return %arg0, %arg1, %c0_i32 : i32, i32, i32
  }
}

</mosaic_0001>

<llo_original>
// kernel: tpu_custom_call.1
$region0: #{tpu_custom_call.1}
  #allocation0 [shape = 'u32[]', space=smem, size = 0x4, offset = 0x4, fixed_abs, tag = 'smem constant byte address 0x4 - core index']
  #allocation1 [shape = 'u32[72,128]{1,0:T(1,128)}', space=vmem, size = 0x9000, scoped, tag = 'internal scratch']
  %s0 = inlined_call_operand.hbm [shape: f32[2,4,16], index: 0, kind: input, shape index: {}]
  %s1 = inlined_call_operand.hbm [shape: f32[2,4,64], index: 1, kind: input, shape index: {}]
  %s2 = inlined_call_operand.hbm [shape: f32[2,4,60], index: 2, kind: input, shape index: {}]
  %s3 = inlined_call_operand.hbm [shape: f32[16,256], index: 3, kind: input, shape index: {}]
  %s4 = inlined_call_operand.hbm [shape: f32[64,256], index: 4, kind: input, shape index: {}]
  %s5 = inlined_call_operand.hbm [shape: f32[60,256], index: 5, kind: input, shape index: {}]
  %s6 = inlined_call_operand.hbm [shape: f32[2,4,256], index: 6, kind: input, shape index: {}]
  %s7 = inlined_call_operand.hbm [shape: f32[2,4,256], index: 7, kind: output, shape index: {}]
  %s8 = sld [smem:[#allocation0]]
  $region89: #{tpu_custom_call.1} parent=0
    _
  %s10 = ssub.s32 1, %s8
  %s11 = scalar_select 0, %s10, %s8
  $region1: #{tpu_custom_call.1} parent=0
    #allocation2 [shape = 'u8[4096]{0}', space=vmem, size = 0x1000, scoped, tag = 'input window, operand 0']
    #allocation3 [shape = 's32[2]{0}', space=sflag, size = 0x8, scoped, tag = 'scoped memory for tpu_custom_call.1']
    #allocation4 [shape = 's32[2]{0}', space=sflag, size = 0x8, scoped, tag = 'scoped memory for tpu_custom_call.1']
    #allocation5 [shape = 'u8[4096]{0}', space=vmem, size = 0x1000, scoped, tag = 'input window, operand 1']
    #allocation6 [shape = 's32[2]{0}', space=sflag, size = 0x8, scoped, tag = 'scoped memory for tpu_custom_call.1']
    #allocation7 [shape = 'u8[4096]{0}', space=vmem, size = 0x1000, scoped, tag = 'input window, operand 2']
    #allocation8 [shape = 'u8[16384]{0}', space=vmem, size = 0x4000, scoped, tag = 'input window, operand 3, single buffered']
    #allocation9 [shape = 's32[1]{0}', space=sflag, size = 0x4, scoped, tag = 'scoped memory for tpu_custom_call.1']
    #allocation10 [shape = 'u8[65536]{0}', space=vmem, size = 0x10000, scoped, tag = 'input window, operand 4, single buffered']
    #allocation11 [shape = 'u8[65536]{0}', space=vmem, size = 0x10000, scoped, tag = 'input window, operand 5, single buffered']
    #allocation12 [shape = 's32[1]{0}', space=sflag, size = 0x4, scoped, tag = 'scoped memory for tpu_custom_call.1']
    #allocation13 [shape = 'u8[8192]{0}', space=vmem, size = 0x2000, scoped, tag = 'input window, operand 6']
    #allocation14 [shape = 'u8[8192]{0}', space=vmem, size = 0x2000, scoped, tag = 'output window, operand 0']
    %12 = vsyncpa [#allocation3], 0
    %s13 = scalar_lea.sflag [#allocation3], 1
    %14 = vsyncpa %s13, 0
    %15 = vsyncpa [#allocation6], 0
    %s16 = scalar_lea.sflag [#allocation6], 1
    %17 = vsyncpa %s16, 0
    %18 = vsyncpa [#allocation9], 0
    %19 = vsyncpa [#allocation12], 0
    %20 = vsyncpa [#allocation4], 0
    %s21 = scalar_lea.sflag [#allocation4], 1
    %22 = vsyncpa %s21, 0
    loop: start=0, step=1, limit=4
    $region2: #{tpu_custom_call.1} parent=1 // loop_pre_header
      _
    $region3: #{tpu_custom_call.1} parent=1 // loop_header
      %s24 = sphi 0, %s28
      %p25 = scmp.ge.s32.totalorder %s24, 4
      %s31 = sphi 0, %s43
      %s32 = sphi 0, %s39
      %s33 = sphi 0, %s31
      %s34 = sphi 0, %s32
      %s35 = sphi 0, %s33
      %s36 = sphi 0, %s34
      %s48 = sphi 0, %s50
      %s51 = sphi 0, %s48
      %s52 = sphi 0, %s51
      %s68 = sphi 0, %s52
      %s76 = sphi 0, %s78
      %s79 = sphi 0, %s76
      %s80 = sphi 0, %s79
      %s96 = sphi 0, %s80
      %s104 = sphi 0, %s106
      %s107 = sphi 0, %s104
      %s108 = sphi 0, %s107
      %s124 = sphi 0, %s108
      %s128 = sphi 0, %s128
      %s130 = sphi 0, %s128
      %s131 = sphi 0, %s130
      %s145 = sphi 0, %s131
      %s149 = sphi 0, %s149
      %s151 = sphi 0, %s149
      %s152 = sphi 0, %s151
      %s166 = sphi 0, %s152
      %s170 = sphi 0, %s170
      %s172 = sphi 0, %s170
      %s173 = sphi 0, %s172
      %s187 = sphi 0, %s173
      %s195 = sphi 0, %s197
      %s198 = sphi 0, %s195
      %s199 = sphi 0, %s198
      %s215 = sphi 0, %s199
      %s223 = sphi 0, %s225
      %s226 = sphi 0, %s223
      %s227 = sphi 0, %s226
      %s243 = sphi 0, %s227
    $region4: #{tpu_custom_call.1} parent=1 // loop_header_branch
      %27 = sbr.rel (%p25) target = $region8
    $region5: #{tpu_custom_call.1} parent=1 // loop_body
      %s29 = ssub.s32 %s24, 1
      %s30 = ssub.s32 %s24, 2
      %s37 = sadd.s32 1, %s32
      %p38 = scmp.ge.s32.totalorder %s37, 1
      %s39 = scalar_select %p38, 0, %s37
      %s40 = sadd.s32 1, %s31
      %s41 = scalar_select %p38, %s40, %s31
      %p42 = scmp.ge.s32.totalorder %s41, 2
      %s43 = scalar_select %p42, 0, %s41
      %s44 = ssub.s32 %s31, %s43
      %s45 = ssub.s32 %s32, %s39
      %s46 = sor.u32 %s44, %s45
      %p47 = scmp.eq.s32.totalorder %s46, 0
      %s49 = sadd.s32 %s48, 1
      %s50 = scalar_select %p47, %s48, %s49
      %p53 = pneg %p47
      %p54 = scmp.eq.s32.totalorder %s24, 1
      %p55 = por %p53, %p54
      %p56 = scmp.ne.s32.totalorder %s48, %s51
      %p57 = scmp.eq.s32.totalorder %s24, 0
      %p58 = por %p56, %p57
      %p59 = scmp.ne.s32.totalorder %s48, %s51
      %p60 = scmp.eq.s32.totalorder %s29, 1
      %p61 = por %p59, %p60
      %p62 = scmp.ne.s32.totalorder %s51, %s52
      %p63 = scmp.eq.s32.totalorder %s29, 0
      %p64 = por %p62, %p63
      %p65 = scmp.ne.s32.totalorder %s51, %s52
      %p66 = scmp.eq.s32.totalorder %s30, 1
      %p67 = por %p65, %p66
      %p69 = scmp.ne.s32.totalorder %s52, %s68
      %p70 = scmp.eq.s32.totalorder %s30, 0
      %p71 = por %p69, %p70
      %s72 = ssub.s32 %s31, %s43
      %s73 = ssub.s32 %s32, %s39
      %s74 = sor.u32 %s72, %s73
      %p75 = scmp.eq.s32.totalorder %s74, 0
      %s77 = sadd.s32 %s76, 1
      %s78 = scalar_select %p75, %s76, %s77
      %p81 = pneg %p75
      %p82 = scmp.eq.s32.totalorder %s24, 1
      %p83 = por %p81, %p82
      %p84 = scmp.ne.s32.totalorder %s76, %s79
      %p85 = scmp.eq.s32.totalorder %s24, 0
      %p86 = por %p84, %p85
      %p87 = scmp.ne.s32.totalorder %s76, %s79
      %p88 = scmp.eq.s32.totalorder %s29, 1
      %p89 = por %p87, %p88
      %p90 = scmp.ne.s32.totalorder %s79, %s80
      %p91 = scmp.eq.s32.totalorder %s29, 0
      %p92 = por %p90, %p91
      %p93 = scmp.ne.s32.totalorder %s79, %s80
      %p94 = scmp.eq.s32.totalorder %s30, 1
      %p95 = por %p93, %p94
      %p97 = scmp.ne.s32.totalorder %s80, %s96
      %p98 = scmp.eq.s32.totalorder %s30, 0
      %p99 = por %p97, %p98
      %s100 = ssub.s32 %s31, %s43
      %s101 = ssub.s32 %s32, %s39
      %s102 = sor.u32 %s100, %s101
      %p103 = scmp.eq.s32.totalorder %s102, 0
      %s105 = sadd.s32 %s104, 1
      %s106 = scalar_select %p103, %s104, %s105
      %p109 = pneg %p103
      %p110 = scmp.eq.s32.totalorder %s24, 1
      %p111 = por %p109, %p110
      %p112 = scmp.ne.s32.totalorder %s104, %s107
      %p113 = scmp.eq.s32.totalorder %s24, 0
      %p114 = por %p112, %p113
      %p115 = scmp.ne.s32.totalorder %s104, %s107
      %p116 = scmp.eq.s32.totalorder %s29, 1
      %p117 = por %p115, %p116
      %p118 = scmp.ne.s32.totalorder %s107, %s108
      %p119 = scmp.eq.s32.totalorder %s29, 0
      %p120 = por %p118, %p119
      %p121 = scmp.ne.s32.totalorder %s107, %s108
      %p122 = scmp.eq.s32.totalorder %s30, 1
      %p123 = por %p121, %p122
      %p125 = scmp.ne.s32.totalorder %s108, %s124
      %p126 = scmp.eq.s32.totalorder %s30, 0
      %p127 = por %p125, %p126
      %s129 = sadd.s32 %s128, 1
      %p132 = scmp.eq.s32.totalorder %s24, 1
      %p133 = scmp.ne.s32.totalorder %s128, %s130
      %p134 = scmp.eq.s32.totalorder %s24, 0
      %p135 = por %p133, %p134
      %p136 = scmp.ne.s32.totalorder %s128, %s130
      %p137 = scmp.eq.s32.totalorder %s29, 1
      %p138 = por %p136, %p137
      %p139 = scmp.ne.s32.totalorder %s130, %s131
      %p140 = scmp.eq.s32.totalorder %s29, 0
      %p141 = por %p139, %p140
      %p142 = scmp.ne.s32.totalorder %s130, %s131
      %p143 = scmp.eq.s32.totalorder %s30, 1
      %p144 = por %p142, %p143
      %p146 = scmp.ne.s32.totalorder %s131, %s145
      %p147 = scmp.eq.s32.totalorder %s30, 0
      %p148 = por %p146, %p147
      %s150 = sadd.s32 %s149, 1
      %p153 = scmp.eq.s32.totalorder %s24, 1
      %p154 = scmp.ne.s32.totalorder %s149, %s151
      %p155 = scmp.eq.s32.totalorder %s24, 0
      %p156 = por %p154, %p155
      %p157 = scmp.ne.s32.totalorder %s149, %s151
      %p158 = scmp.eq.s32.totalorder %s29, 1
      %p159 = por %p157, %p158
      %p160 = scmp.ne.s32.totalorder %s151, %s152
      %p161 = scmp.eq.s32.totalorder %s29, 0
      %p162 = por %p160, %p161
      %p163 = scmp.ne.s32.totalorder %s151, %s152
      %p164 = scmp.eq.s32.totalorder %s30, 1
      %p165 = por %p163, %p164
      %p167 = scmp.ne.s32.totalorder %s152, %s166
      %p168 = scmp.eq.s32.totalorder %s30, 0
      %p169 = por %p167, %p168
      %s171 = sadd.s32 %s170, 1
      %p174 = scmp.eq.s32.totalorder %s24, 1
      %p175 = scmp.ne.s32.totalorder %s170, %s172
      %p176 = scmp.eq.s32.totalorder %s24, 0
      %p177 = por %p175, %p176
      %p178 = scmp.ne.s32.totalorder %s170, %s172
      %p179 = scmp.eq.s32.totalorder %s29, 1
      %p180 = por %p178, %p179
      %p181 = scmp.ne.s32.totalorder %s172, %s173
      %p182 = scmp.eq.s32.totalorder %s29, 0
      %p183 = por %p181, %p182
      %p184 = scmp.ne.s32.totalorder %s172, %s173
      %p185 = scmp.eq.s32.totalorder %s30, 1
      %p186 = por %p184, %p185
      %p188 = scmp.ne.s32.totalorder %s173, %s187
      %p189 = scmp.eq.s32.totalorder %s30, 0
      %p190 = por %p188, %p189
      %s191 = ssub.s32 %s31, %s43
      %s192 = ssub.s32 %s32, %s39
      %s193 = sor.u32 %s191, %s192
      %p194 = scmp.eq.s32.totalorder %s193, 0
      %s196 = sadd.s32 %s195, 1
      %s197 = scalar_select %p194, %s195, %s196
      %p200 = pneg %p194
      %p201 = scmp.eq.s32.totalorder %s24, 1
      %p202 = por %p200, %p201
      %p203 = scmp.ne.s32.totalorder %s195, %s198
      %p204 = scmp.eq.s32.totalorder %s24, 0
      %p205 = por %p203, %p204
      %p206 = scmp.ne.s32.totalorder %s195, %s198
      %p207 = scmp.eq.s32.totalorder %s29, 1
      %p208 = por %p206, %p207
      %p209 = scmp.ne.s32.totalorder %s198, %s199
      %p210 = scmp.eq.s32.totalorder %s29, 0
      %p211 = por %p209, %p210
      %p212 = scmp.ne.s32.totalorder %s198, %s199
      %p213 = scmp.eq.s32.totalorder %s30, 1
      %p214 = por %p212, %p213
      %p216 = scmp.ne.s32.totalorder %s199, %s215
      %p217 = scmp.eq.s32.totalorder %s30, 0
      %p218 = por %p216, %p217
      %s219 = ssub.s32 %s31, %s43
      %s220 = ssub.s32 %s32, %s39
      %s221 = sor.u32 %s219, %s220
      %p222 = scmp.eq.s32.totalorder %s221, 0
      %s224 = sadd.s32 %s223, 1
      %s225 = scalar_select %p222, %s223, %s224
      %p228 = pneg %p222
      %p229 = scmp.eq.s32.totalorder %s24, 1
      %p230 = por %p228, %p229
      %p231 = scmp.ne.s32.totalorder %s223, %s226
      %p232 = scmp.eq.s32.totalorder %s24, 0
      %p233 = por %p231, %p232
      %p234 = scmp.ne.s32.totalorder %s223, %s226
      %p235 = scmp.eq.s32.totalorder %s29, 1
      %p236 = por %p234, %p235
      %p237 = scmp.ne.s32.totalorder %s226, %s227
      %p238 = scmp.eq.s32.totalorder %s29, 0
      %p239 = por %p237, %p238
      %p240 = scmp.ne.s32.totalorder %s226, %s227
      %p241 = scmp.eq.s32.totalorder %s30, 1
      %p242 = por %p240, %p241
      %p244 = scmp.ne.s32.totalorder %s227, %s243
      %p245 = scmp.eq.s32.totalorder %s30, 0
      %p246 = por %p244, %p245
      %p247 = scmp.le.s32.totalorder 1, %s24
      %p248 = scmp.lt.s32.totalorder %s24, 3
      %p249 = pnand %p247, %p248
      %p250 = pneg %p249
      // Predicated region
      $region9: #{tpu_custom_call.1} parent=5 // pred_check
        _
      $region10: #{tpu_custom_call.1} parent=5 // pred_check_branch
        %252 = sbr.rel (%p249) target = $region12
      $region11: #{tpu_custom_call.1} parent=5 // pred_region
        %s253 = ssub.s32 %s24, 1
        // Predicated region
        $region13: #{tpu_custom_call.1} parent=11 // pred_check
          %p254 = pneg %p141
        $region14: #{tpu_custom_call.1} parent=11 // pred_check_branch
          %256 = sbr.rel (%p254) target = $region16
        $region15: #{tpu_custom_call.1} parent=11 // pred_region
          %258 = vsyncadd [#allocation9], 0
          %s259 = sshll.u32 %s3, 4
          %s260 = int_to_ptr.hbm [resolvable:$true] %s259
          %s261 = sshll.u32 [#allocation8], 4
          %s262 = int_to_ptr.vmem [resolvable:$true] %s261
          %267 = dma.hbm_to_vmem [thread:$0]  %s260, 512, %s262, [#allocation9], 256, 256, 16
        $region16: #{tpu_custom_call.1} parent=11 // pred_fallthru
          _
        // Predicated region
        $region17: #{tpu_custom_call.1} parent=11 // pred_check
          %p268 = pneg %p162
        $region18: #{tpu_custom_call.1} parent=11 // pred_check_branch
          %270 = sbr.rel (%p268) target = $region20
        $region19: #{tpu_custom_call.1} parent=11 // pred_region
          %272 = vsyncadd [#allocation9], 0
          %s273 = sshll.u32 %s4, 4
          %s274 = int_to_ptr.hbm [resolvable:$true] %s273
          %s275 = sshll.u32 [#allocation10], 4
          %s276 = int_to_ptr.vmem [resolvable:$true] %s275
          %281 = dma.hbm_to_vmem [thread:$0]  %s274, 2048, %s276, [#allocation9], 256, 256, 16
        $region20: #{tpu_custom_call.1} parent=11 // pred_fallthru
          _
        // Predicated region
        $region21: #{tpu_custom_call.1} parent=11 // pred_check
          %p282 = pneg %p183
        $region22: #{tpu_custom_call.1} parent=11 // pred_check_branch
          %284 = sbr.rel (%p282) target = $region24
        $region23: #{tpu_custom_call.1} parent=11 // pred_region
          %286 = vsyncadd [#allocation12], 0
          %s287 = sshll.u32 %s5, 4
          %s288 = int_to_ptr.hbm [resolvable:$true] %s287
          %s289 = sshll.u32 [#allocation11], 4
          %s290 = int_to_ptr.vmem [resolvable:$true] %s289
          %295 = dma.hbm_to_vmem [thread:$0]  %s288, 2048, %s290, [#allocation12], 256, 256, 16
        $region24: #{tpu_custom_call.1} parent=11 // pred_fallthru
          _
      $region12: #{tpu_custom_call.1} parent=5 // pred_fallthru
        _
      %p296 = scmp.lt.s32.totalorder %s24, 2
      // Predicated region
      $region25: #{tpu_custom_call.1} parent=5 // pred_check
        %p297 = pneg %p296
      $region26: #{tpu_custom_call.1} parent=5 // pred_check_branch
        %299 = sbr.rel (%p297) target = $region28
      $region27: #{tpu_custom_call.1} parent=5 // pred_region
        // Predicated region
        $region29: #{tpu_custom_call.1} parent=27 // pred_check
          %p300 = pneg %p58
        $region30: #{tpu_custom_call.1} parent=27 // pred_check_branch
          %302 = sbr.rel (%p300) target = $region32
        $region31: #{tpu_custom_call.1} parent=27 // pred_region
          %s303 = sand.u32 %s24, 1
          %s304 = scalar_lea.sflag [#allocation3], %s303
          %s305 = sand.u32 %s48, 1
          %s306 = smul.addr %s305, 4
          %s307 = scalar_lea.vmem [#allocation2], %s306
          %309 = vsyncadd %s304, 0
          %s310 = sadd.s32 %s32, %s31
          %s311 = smul.addr %s310, 4
          %s312 = scalar_lea.hbm %s0, %s311
          %s314 = sshll.u32 %s312, 4
          %s315 = int_to_ptr.hbm [resolvable:$true] %s314
          %s316 = sshll.u32 %s307, 4
          %s317 = int_to_ptr.vmem [resolvable:$true] %s316
          %319 = dma.hbm_to_vmem [thread:$0]  %s315, 64, %s317, %s304
        $region32: #{tpu_custom_call.1} parent=27 // pred_fallthru
          _
        // Predicated region
        $region33: #{tpu_custom_call.1} parent=27 // pred_check
          %p320 = pneg %p86
        $region34: #{tpu_custom_call.1} parent=27 // pred_check_branch
          %322 = sbr.rel (%p320) target = $region36
        $region35: #{tpu_custom_call.1} parent=27 // pred_region
          %s323 = sand.u32 %s24, 1
          %s324 = scalar_lea.sflag [#allocation6], %s323
          %s325 = sand.u32 %s76, 1
          %s326 = smul.addr %s325, 4
          %s327 = scalar_lea.vmem [#allocation5], %s326
          %329 = vsyncadd %s324, 0
          %s330 = sadd.s32 %s32, %s31
          %s331 = smul.addr %s330, 4
          %s332 = scalar_lea.hbm %s1, %s331
          %s334 = sshll.u32 %s332, 4
          %s335 = int_to_ptr.hbm [resolvable:$true] %s334
          %s336 = sshll.u32 %s327, 4
          %s337 = int_to_ptr.vmem [resolvable:$true] %s336
          %339 = dma.hbm_to_vmem [thread:$0]  %s335, 64, %s337, %s324
        $region36: #{tpu_custom_call.1} parent=27 // pred_fallthru
          _
        // Predicated region
        $region37: #{tpu_custom_call.1} parent=27 // pred_check
          %p340 = pneg %p114
        $region38: #{tpu_custom_call.1} parent=27 // pred_check_branch
          %342 = sbr.rel (%p340) target = $region40
        $region39: #{tpu_custom_call.1} parent=27 // pred_region
          %s343 = sand.u32 %s24, 1
          %s344 = scalar_lea.sflag [#allocation6], %s343
          %s345 = sand.u32 %s104, 1
          %s346 = smul.addr %s345, 4
          %s347 = scalar_lea.vmem [#allocation7], %s346
          %349 = vsyncadd %s344, 0
          %s350 = sadd.s32 %s32, %s31
          %s351 = smul.addr %s350, 4
          %s352 = scalar_lea.hbm %s2, %s351
          %s354 = sshll.u32 %s352, 4
          %s355 = int_to_ptr.hbm [resolvable:$true] %s354
          %s356 = sshll.u32 %s347, 4
          %s357 = int_to_ptr.vmem [resolvable:$true] %s356
          %359 = dma.hbm_to_vmem [thread:$0]  %s355, 64, %s357, %s344
        $region40: #{tpu_custom_call.1} parent=27 // pred_fallthru
          _
        // Predicated region
        $region41: #{tpu_custom_call.1} parent=27 // pred_check
          %p360 = pneg %p205
        $region42: #{tpu_custom_call.1} parent=27 // pred_check_branch
          %362 = sbr.rel (%p360) target = $region44
        $region43: #{tpu_custom_call.1} parent=27 // pred_region
          %s363 = sand.u32 %s24, 1
          %s364 = scalar_lea.sflag [#allocation3], %s363
          %s365 = sand.u32 %s195, 1
          %s366 = smul.addr %s365, 8
          %s367 = scalar_lea.vmem [#allocation13], %s366
          %369 = vsyncadd %s364, 0
          %s370 = smul.addr %s32, 2
          %s371 = smul.addr %s31, 2
          %s372 = sadd.s32 %s370, %s371
          %s373 = smul.addr %s372, 4
          %s374 = scalar_lea.hbm %s6, %s373
          %s376 = sshll.u32 %s374, 4
          %s377 = int_to_ptr.hbm [resolvable:$true] %s376
          %s378 = sshll.u32 %s367, 4
          %s379 = int_to_ptr.vmem [resolvable:$true] %s378
          %381 = dma.hbm_to_vmem [thread:$0]  %s377, 128, %s379, %s364
        $region44: #{tpu_custom_call.1} parent=27 // pred_fallthru
          _
      $region28: #{tpu_custom_call.1} parent=5 // pred_fallthru
        _
      %p382 = scmp.le.s32.totalorder 1, %s24
      %p383 = scmp.lt.s32.totalorder %s24, 3
      %p384 = pnand %p382, %p383
      %p385 = pneg %p384
      // Predicated region
      $region45: #{tpu_custom_call.1} parent=5 // pred_check
        _
      $region46: #{tpu_custom_call.1} parent=5 // pred_check_branch
        %387 = sbr.rel (%p384) target = $region48
      $region47: #{tpu_custom_call.1} parent=5 // pred_region
        %s388 = ssub.s32 %s24, 1
        %s389 = sand.u32 %s29, 1
        %s390 = scalar_lea.sflag [#allocation3], %s389
        %s391 = sand.u32 %s51, 1
        %s392 = smul.addr %s391, 4
        %s393 = scalar_lea.vmem [#allocation2], %s392
        // Predicated region
        $region49: #{tpu_custom_call.1} parent=47 // pred_check
          %p394 = pneg %p64
        $region50: #{tpu_custom_call.1} parent=47 // pred_check_branch
          %396 = sbr.rel (%p394) target = $region52
        $region51: #{tpu_custom_call.1} parent=47 // pred_region
          %398 = dma.done %s390, 64
        $region52: #{tpu_custom_call.1} parent=47 // pred_fallthru
          _
        %s399 = sand.u32 %s29, 1
        %s400 = scalar_lea.sflag [#allocation6], %s399
        %s401 = sand.u32 %s79, 1
        %s402 = smul.addr %s401, 4
        %s403 = scalar_lea.vmem [#allocation5], %s402
        // Predicated region
        $region53: #{tpu_custom_call.1} parent=47 // pred_check
          %p404 = pneg %p92
        $region54: #{tpu_custom_call.1} parent=47 // pred_check_branch
          %406 = sbr.rel (%p404) target = $region56
        $region55: #{tpu_custom_call.1} parent=47 // pred_region
          %408 = dma.done %s400, 64
        $region56: #{tpu_custom_call.1} parent=47 // pred_fallthru
          _
        %s409 = sand.u32 %s29, 1
        %s410 = scalar_lea.sflag [#allocation6], %s409
        %s411 = sand.u32 %s107, 1
        %s412 = smul.addr %s411, 4
        %s413 = scalar_lea.vmem [#allocation7], %s412
        // Predicated region
        $region57: #{tpu_custom_call.1} parent=47 // pred_check
          %p414 = pneg %p120
        $region58: #{tpu_custom_call.1} parent=47 // pred_check_branch
          %416 = sbr.rel (%p414) target = $region60
        $region59: #{tpu_custom_call.1} parent=47 // pred_region
          %418 = dma.done %s410, 64
        $region60: #{tpu_custom_call.1} parent=47 // pred_fallthru
          _
        // Predicated region
        $region61: #{tpu_custom_call.1} parent=47 // pred_check
          %p419 = pneg %p141
        $region62: #{tpu_custom_call.1} parent=47 // pred_check_branch
          %421 = sbr.rel (%p419) target = $region64
        $region63: #{tpu_custom_call.1} parent=47 // pred_region
          %423 = dma.done [#allocation9], 512
        $region64: #{tpu_custom_call.1} parent=47 // pred_fallthru
          _
        // Predicated region
        $region65: #{tpu_custom_call.1} parent=47 // pred_check
          %p424 = pneg %p162
        $region66: #{tpu_custom_call.1} parent=47 // pred_check_branch
          %426 = sbr.rel (%p424) target = $region68
        $region67: #{tpu_custom_call.1} parent=47 // pred_region
          %428 = dma.done [#allocation9], 2048
        $region68: #{tpu_custom_call.1} parent=47 // pred_fallthru
          _
        // Predicated region
        $region69: #{tpu_custom_call.1} parent=47 // pred_check
          %p429 = pneg %p183
        $region70: #{tpu_custom_call.1} parent=47 // pred_check_branch
          %431 = sbr.rel (%p429) target = $region72
        $region71: #{tpu_custom_call.1} parent=47 // pred_region
          %433 = dma.done [#allocation12], 2048
        $region72: #{tpu_custom_call.1} parent=47 // pred_fallthru
          _
        %s434 = sand.u32 %s29, 1
        %s435 = scalar_lea.sflag [#allocation3], %s434
        %s436 = sand.u32 %s198, 1
        %s437 = smul.addr %s436, 8
        %s438 = scalar_lea.vmem [#allocation13], %s437
        // Predicated region
        $region73: #{tpu_custom_call.1} parent=47 // pred_check
          %p439 = pneg %p211
        $region74: #{tpu_custom_call.1} parent=47 // pred_check_branch
          %441 = sbr.rel (%p439) target = $region76
        $region75: #{tpu_custom_call.1} parent=47 // pred_region
          %443 = dma.done %s435, 128
        $region76: #{tpu_custom_call.1} parent=47 // pred_fallthru
          _
        %s444 = sand.u32 %s29, 1
        %s445 = scalar_lea.sflag [#allocation3], %s444
        %s446 = sand.u32 %s51, 1
        %s447 = smul.addr %s446, 4
        %s448 = scalar_lea.vmem [#allocation2], %s447
        %p449 = pneg %p64
        %p450 = pneg %p61
        %s451 = sand.u32 %s29, 1
        %s452 = scalar_lea.sflag [#allocation6], %s451
        %s453 = sand.u32 %s79, 1
        %s454 = smul.addr %s453, 4
        %s455 = scalar_lea.vmem [#allocation5], %s454
        %p456 = pneg %p92
        %p457 = pneg %p89
        %s458 = sand.u32 %s29, 1
        %s459 = scalar_lea.sflag [#allocation6], %s458
        %s460 = sand.u32 %s107, 1
        %s461 = smul.addr %s460, 4
        %s462 = scalar_lea.vmem [#allocation7], %s461
        %p463 = pneg %p120
        %p464 = pneg %p117
        %p465 = pneg %p141
        %p466 = pneg %p138
        %p467 = pneg %p162
        %p468 = pneg %p159
        %p469 = pneg %p183
        %p470 = pneg %p180
        %s471 = sand.u32 %s29, 1
        %s472 = scalar_lea.sflag [#allocation3], %s471
        %s473 = sand.u32 %s198, 1
        %s474 = smul.addr %s473, 8
        %s475 = scalar_lea.vmem [#allocation13], %s474
        %p476 = pneg %p211
        %p477 = pneg %p208
        %p478 = pneg %p239
        %p479 = pneg %p236
        %s480 = sand.u32 %s226, 1
        %s481 = scalar_lea.sflag [#allocation4], %s480
        %s482 = sand.u32 %s226, 1
        %s483 = smul.addr %s482, 8
        %s484 = scalar_lea.vmem [#allocation14], %s483
        %v485 = vld [vmem:[%s438] sm:$0xff]
        %486 = vst [vmem:[%s484] sm:$0xff] %v485
        %v487 = vld [vmem:[#allocation8] sm:$0xff]
        %v488 = vld [vmem:[#allocation8 + $0x8] sm:$0xff]
        %v489 = vld [vmem:[#allocation8 + $0x10] sm:$0xff]
        %v490 = vld [vmem:[#allocation8 + $0x18] sm:$0xff]
        %v491 = vld [vmem:[%s393] sm:$0xf]
        %vm492 = vcmask 130048
        %v494 = vsel %vm492, %v491, 0
        %496 = vmatpush.msra.mxu0 0.0
        %497 = vmatpush.msra.mxu0 0.0
        %498 = vmatpush.msra.mxu0 0.0
        %499 = vmatpush.msra.mxu0 0.0
        %500 = vmatpush.msra.mxu0 0.0
        %501 = vmatpush.msra.mxu0 0.0
        %502 = vmatpush.msra.mxu0 0.0
        %503 = vmatpush.msra.mxu0 0.0
        %504 = vmatpush.msra.mxu0 0.0
        %505 = vmatpush.msra.mxu0 0.0
        %506 = vmatpush.msra.mxu0 0.0
        %507 = vmatpush.msra.mxu0 0.0
        %508 = vmatpush.msra.mxu0 0.0
        %509 = vmatpush.msra.mxu0 0.0
        %510 = vmatpush.msra.mxu0 %v489
        %511 = vmatpush.msra.mxu0 %v487
        %512 = vmatmul.f32.gmra.mxu0 %v494
        %v513 = vpop.f32.mrf.mxu0
        %v514 = vadd.f32 0.0, %v513
        %515 = vdwg.mxu0
        %516 = vmatpush.msra.mxu0 0.0
        %517 = vmatpush.msra.mxu0 0.0
        %518 = vmatpush.msra.mxu0 0.0
        %519 = vmatpush.msra.mxu0 0.0
        %520 = vmatpush.msra.mxu0 0.0
        %521 = vmatpush.msra.mxu0 0.0
        %522 = vmatpush.msra.mxu0 0.0
        %523 = vmatpush.msra.mxu0 0.0
        %524 = vmatpush.msra.mxu0 0.0
        %525 = vmatpush.msra.mxu0 0.0
        %526 = vmatpush.msra.mxu0 0.0
        %527 = vmatpush.msra.mxu0 0.0
        %528 = vmatpush.msra.mxu0 0.0
        %529 = vmatpush.msra.mxu0 0.0
        %530 = vmatpush.msra.mxu0 %v490
        %531 = vmatpush.msra.mxu0 %v488
        %532 = vmatmul.f32.gmra.mxu0 %v494
        %v533 = vpop.f32.mrf.mxu0
        %v534 = vadd.f32 0.0, %v533
        %535 = vdwg.mxu0
        %v536 = vld [vmem:[%s484] sm:$0xff]
        %v539 = vrot.slane %v534, 4
        %vm540 = vcmask 1043456
        %v541 = vsel %vm540, %v514, %v539
        %v543 = vadd.f32 %v536, %v541
        %544 = vst [vmem:[%s484] sm:$0xff] %v543
        %v545 = vld [vmem:[#allocation10] sm:$0xff]
        %v546 = vld [vmem:[#allocation10 + $0x8] sm:$0xff]
        %v547 = vld [vmem:[#allocation10 + $0x10] sm:$0xff]
        %v548 = vld [vmem:[#allocation10 + $0x18] sm:$0xff]
        %v549 = vld [vmem:[#allocation10 + $0x20] sm:$0xff]
        %v550 = vld [vmem:[#allocation10 + $0x28] sm:$0xff]
        %v551 = vld [vmem:[#allocation10 + $0x30] sm:$0xff]
        %v552 = vld [vmem:[#allocation10 + $0x38] sm:$0xff]
        %v553 = vld [vmem:[#allocation10 + $0x40] sm:$0xff]
        %v554 = vld [vmem:[#allocation10 + $0x48] sm:$0xff]
        %v555 = vld [vmem:[#allocation10 + $0x50] sm:$0xff]
        %v556 = vld [vmem:[#allocation10 + $0x58] sm:$0xff]
        %v557 = vld [vmem:[#allocation10 + $0x60] sm:$0xff]
        %v558 = vld [vmem:[#allocation10 + $0x68] sm:$0xff]
        %v559 = vld [vmem:[#allocation10 + $0x70] sm:$0xff]
        %v560 = vld [vmem:[#allocation10 + $0x78] sm:$0xff]
        %v561 = vld [vmem:[%s403] sm:$0xf]
        %vm562 = vcmask 523264
        %v564 = vsel %vm562, %v561, 0
        %566 = vmatpush.msra.mxu0 0.0
        %567 = vmatpush.msra.mxu0 0.0
        %568 = vmatpush.msra.mxu0 0.0
        %569 = vmatpush.msra.mxu0 0.0
        %570 = vmatpush.msra.mxu0 0.0
        %571 = vmatpush.msra.mxu0 0.0
        %572 = vmatpush.msra.mxu0 0.0
        %573 = vmatpush.msra.mxu0 0.0
        %574 = vmatpush.msra.mxu0 %v559
        %575 = vmatpush.msra.mxu0 %v557
        %576 = vmatpush.msra.mxu0 %v555
        %577 = vmatpush.msra.mxu0 %v553
        %578 = vmatpush.msra.mxu0 %v551
        %579 = vmatpush.msra.mxu0 %v549
        %580 = vmatpush.msra.mxu0 %v547
        %581 = vmatpush.msra.mxu0 %v545
        %582 = vmatmul.f32.gmra.mxu0 %v564
        %v583 = vpop.f32.mrf.mxu0
        %v584 = vadd.f32 0.0, %v583
        %585 = vdwg.mxu0
        %586 = vmatpush.msra.mxu0 0.0
        %587 = vmatpush.msra.mxu0 0.0
        %588 = vmatpush.msra.mxu0 0.0
        %589 = vmatpush.msra.mxu0 0.0
        %590 = vmatpush.msra.mxu0 0.0
        %591 = vmatpush.msra.mxu0 0.0
        %592 = vmatpush.msra.mxu0 0.0
        %593 = vmatpush.msra.mxu0 0.0
        %594 = vmatpush.msra.mxu0 %v560
        %595 = vmatpush.msra.mxu0 %v558
        %596 = vmatpush.msra.mxu0 %v556
        %597 = vmatpush.msra.mxu0 %v554
        %598 = vmatpush.msra.mxu0 %v552
        %599 = vmatpush.msra.mxu0 %v550
        %600 = vmatpush.msra.mxu0 %v548
        %601 = vmatpush.msra.mxu0 %v546
        %602 = vmatmul.f32.gmra.mxu0 %v564
        %v603 = vpop.f32.mrf.mxu0
        %v604 = vadd.f32 0.0, %v603
        %605 = vdwg.mxu0
        %v606 = vld [vmem:[%s484] sm:$0xff]
        %v609 = vrot.slane %v604, 4
        %v610 = vsel %vm540, %v584, %v609
        %v612 = vadd.f32 %v606, %v610
        %613 = vst [vmem:[%s484] sm:$0xff] %v612
        %v614 = vld [vmem:[#allocation11] sm:$0xff]
        %v615 = vld [vmem:[#allocation11 + $0x8] sm:$0xff]
        %v616 = vld [vmem:[#allocation11 + $0x10] sm:$0xff]
        %v617 = vld [vmem:[#allocation11 + $0x18] sm:$0xff]
        %v618 = vld [vmem:[#allocation11 + $0x20] sm:$0xff]
        %v619 = vld [vmem:[#allocation11 + $0x28] sm:$0xff]
        %v620 = vld [vmem:[#allocation11 + $0x30] sm:$0xff]
        %v621 = vld [vmem:[#allocation11 + $0x38] sm:$0xff]
        %v622 = vld [vmem:[#allocation11 + $0x40] sm:$0xff]
        %v623 = vld [vmem:[#allocation11 + $0x48] sm:$0xff]
        %v624 = vld [vmem:[#allocation11 + $0x50] sm:$0xff]
        %v625 = vld [vmem:[#allocation11 + $0x58] sm:$0xff]
        %v626 = vld [vmem:[#allocation11 + $0x60] sm:$0xff]
        %v627 = vld [vmem:[#allocation11 + $0x68] sm:$0xff]
        %v628 = vld [vmem:[#allocation11 + $0x70] sm:$0xf]
        %v629 = vld [vmem:[#allocation11 + $0x78] sm:$0xf]
        %v630 = vld [vmem:[%s413] sm:$0xf]
        %vm631 = vcmask 490496
        %v633 = vsel %vm631, %v630, 0
        %v636 = vsel %vm540, %v628, 0
        %v639 = vsel %vm540, %v629, 0
        %641 = vmatpush.msra.mxu0 0.0
        %642 = vmatpush.msra.mxu0 0.0
        %643 = vmatpush.msra.mxu0 0.0
        %644 = vmatpush.msra.mxu0 0.0
        %645 = vmatpush.msra.mxu0 0.0
        %646 = vmatpush.msra.mxu0 0.0
        %647 = vmatpush.msra.mxu0 0.0
        %648 = vmatpush.msra.mxu0 0.0
        %649 = vmatpush.msra.mxu0 %v636
        %650 = vmatpush.msra.mxu0 %v626
        %651 = vmatpush.msra.mxu0 %v624
        %652 = vmatpush.msra.mxu0 %v622
        %653 = vmatpush.msra.mxu0 %v620
        %654 = vmatpush.msra.mxu0 %v618
        %655 = vmatpush.msra.mxu0 %v616
        %656 = vmatpush.msra.mxu0 %v614
        %657 = vmatmul.f32.gmra.mxu0 %v633
        %v658 = vpop.f32.mrf.mxu0
        %v659 = vadd.f32 0.0, %v658
        %660 = vdwg.mxu0
        %661 = vmatpush.msra.mxu0 0.0
        %662 = vmatpush.msra.mxu0 0.0
        %663 = vmatpush.msra.mxu0 0.0
        %664 = vmatpush.msra.mxu0 0.0
        %665 = vmatpush.msra.mxu0 0.0
        %666 = vmatpush.msra.mxu0 0.0
        %667 = vmatpush.msra.mxu0 0.0
        %668 = vmatpush.msra.mxu0 0.0
        %669 = vmatpush.msra.mxu0 %v639
        %670 = vmatpush.msra.mxu0 %v627
        %671 = vmatpush.msra.mxu0 %v625
        %672 = vmatpush.msra.mxu0 %v623
        %673 = vmatpush.msra.mxu0 %v621
        %674 = vmatpush.msra.mxu0 %v619
        %675 = vmatpush.msra.mxu0 %v617
        %676 = vmatpush.msra.mxu0 %v615
        %677 = vmatmul.f32.gmra.mxu0 %v633
        %v678 = vpop.f32.mrf.mxu0
        %v679 = vadd.f32 0.0, %v678
        %680 = vdwg.mxu0
        %v681 = vld [vmem:[%s484] sm:$0xff]
        %v684 = vrot.slane %v679, 4
        %v685 = vsel %vm540, %v659, %v684
        %v687 = vadd.f32 %v681, %v685
        %688 = vst [vmem:[%s484] sm:$0xff] %v687
        %s689 = sand.u32 %s226, 1
        %s690 = scalar_lea.sflag [#allocation4], %s689
        %s691 = sand.u32 %s226, 1
        %s692 = smul.addr %s691, 8
        %s693 = scalar_lea.vmem [#allocation14], %s692
        // Predicated region
        $region77: #{tpu_custom_call.1} parent=47 // pred_check
          %p694 = pneg %p236
        $region78: #{tpu_custom_call.1} parent=47 // pred_check_branch
          %696 = sbr.rel (%p694) target = $region80
        $region79: #{tpu_custom_call.1} parent=47 // pred_region
          %698 = vsyncadd %s690, 0
          %s699 = smul.addr %s34, 2
          %s700 = smul.addr %s33, 2
          %s701 = sadd.s32 %s699, %s700
          %s702 = smul.addr %s701, 4
          %s703 = scalar_lea.hbm %s7, %s702
          %s705 = sshll.u32 %s693, 4
          %s706 = int_to_ptr.vmem [resolvable:$true] %s705
          %s707 = sshll.u32 %s703, 4
          %s708 = int_to_ptr.hbm [resolvable:$true] %s707
          %710 = dma.vmem_to_hbm [thread:$0]  %s706, 128, %s708, %s690
        $region80: #{tpu_custom_call.1} parent=47 // pred_fallthru
          _
      $region48: #{tpu_custom_call.1} parent=5 // pred_fallthru
        _
      %p711 = scmp.le.s32.totalorder 2, %s24
      // Predicated region
      $region81: #{tpu_custom_call.1} parent=5 // pred_check
        %p712 = pneg %p711
      $region82: #{tpu_custom_call.1} parent=5 // pred_check_branch
        %714 = sbr.rel (%p712) target = $region84
      $region83: #{tpu_custom_call.1} parent=5 // pred_region
        %s715 = ssub.s32 %s24, 2
        // Predicated region
        $region85: #{tpu_custom_call.1} parent=83 // pred_check
          %p716 = pneg %p242
        $region86: #{tpu_custom_call.1} parent=83 // pred_check_branch
          %718 = sbr.rel (%p716) target = $region88
        $region87: #{tpu_custom_call.1} parent=83 // pred_region
          %s719 = sand.u32 %s227, 1
          %s720 = scalar_lea.sflag [#allocation4], %s719
          %s721 = sand.u32 %s227, 1
          %s722 = smul.addr %s721, 8
          %s723 = scalar_lea.vmem [#allocation14], %s722
          %725 = dma.done %s720, 128
        $region88: #{tpu_custom_call.1} parent=83 // pred_fallthru
          _
      $region84: #{tpu_custom_call.1} parent=5 // pred_fallthru
        _
    $region6: #{tpu_custom_call.1} parent=1 // loop_footer
      %s28 = sadd.s32 1, %s24
    $region7: #{tpu_custom_call.1} parent=1 // loop_footer_branch
      %23 = sbr.rel target = $region3
    $region8: #{tpu_custom_call.1} parent=1 // loop_exit
      _
    %726 = vsyncpa [#allocation3], 1
    %s727 = scalar_lea.sflag [#allocation3], 1
    %728 = vsyncpa %s727, 1
    %729 = vsyncpa [#allocation6], 1
    %s730 = scalar_lea.sflag [#allocation6], 1
    %731 = vsyncpa %s730, 1
    %732 = vsyncpa [#allocation9], 1
    %733 = vsyncpa [#allocation12], 1
    %734 = vsyncpa [#allocation4], 1
    %s735 = scalar_lea.sflag [#allocation4], 1
    %736 = vsyncpa %s735, 1

</llo_original>
